<compile_context>
chip_gen: v6e
topology: v6e:2x2x1
jax: 0.10.0
libtpu: 0.0.40
codegen_flags: <defaults>
</compile_context>

<pallas_src>
import functools

import jax
import jax.numpy as jnp
from jax.experimental import pallas as pl
from jax.experimental.pallas import tpu as pltpu


def _round_up(x, m):
    return ((x + m - 1) // m) * m


# ---------------------------------------------------------------------------
# Pallas kernel: fused bf16 (A @ W) + bias [+ ReLU], f32 accumulate
# ---------------------------------------------------------------------------
def _mm_bias_act_kernel(a_ref, w_ref, b_ref, o_ref, *, relu):
    acc = jnp.dot(a_ref[...], w_ref[...], preferred_element_type=jnp.float32)
    acc = acc + b_ref[...]              # b_ref is (1, N): broadcasts over rows
    if relu:
        acc = jnp.maximum(acc, 0.0)
    o_ref[...] = acc.astype(o_ref.dtype)


def matmul_bias_act(a, w, b, relu=False, tile_m=1024):
    """a: [M, K], w: [K, N], b: [N] -> f32 [M, N] via a Pallas MXU kernel.

    A and W are cast to bf16 before the dot (half the VMEM/HBM bytes,
    2-4x MXU throughput); accumulation + epilogue stay in f32.  Tiled over M
    only: K (<= 32*depth) and N (= Cout*k*k <= 800) are small enough to keep
    full, lane-dense blocks resident in every generation's VMEM budget.
    """
    M, K = a.shape
    K2, N = w.shape
    assert K == K2
    tm = _round_up(M, 8) if M <= tile_m else tile_m
    M_pad = _round_up(M, tm)
    if M_pad != M:
        a = jnp.pad(a, ((0, M_pad - M), (0, 0)))
    grid = (M_pad // tm,)
    out = pl.pallas_call(
        functools.partial(_mm_bias_act_kernel, relu=relu),
        out_shape=jax.ShapeDtypeStruct((M_pad, N), jnp.float32),
        grid=grid,
        in_specs=[
            pl.BlockSpec((tm, K), lambda i: (i, 0)),   # A tile   (bf16)
            pl.BlockSpec((K, N), lambda i: (0, 0)),    # weights  (bf16, full)
            pl.BlockSpec((1, N), lambda i: (0, 0)),    # bias row (f32)
        ],
        out_specs=pl.BlockSpec((tm, N), lambda i: (i, 0)),
        compiler_params=pltpu.CompilerParams(
            dimension_semantics=("parallel",)),
    )(a.astype(jnp.bfloat16), w.astype(jnp.bfloat16),
      b.reshape(1, N).astype(jnp.float32))
    if M_pad != M:
        out = out[:M]
    return out


# ---------------------------------------------------------------------------
# ConvTranspose2d (PyTorch semantics: padding=0, output_padding=0), NHWC,
# dual formulation: one lane-dense matmul + col2im overlap-add.
# ---------------------------------------------------------------------------
def conv_transpose2d_nhwc(x, w, b, stride, relu):
    """x: [B, H, W, Cin] (NHWC), w: [Cin, Cout, k, k] (PyTorch layout), b: [Cout]."""
    B, H, W_, Cin = x.shape
    _, Cout, k, _ = w.shape
    Ho = (H - 1) * stride + k
    Wo = (W_ - 1) * stride + k

    # Weight as [Cin, (kh, kw, co)] -- no kernel flip needed in the dual form.
    wmat = w.transpose(0, 2, 3, 1).reshape(Cin, k * k * Cout)
    a = x.reshape(B * H * W_, Cin)          # NHWC -> free reshape, no transpose

    if H == 1 and W_ == 1:
        # 1x1 spatial input (ct1): each output pixel receives exactly one
        # contribution, so bias + ReLU fuse into the matmul and no
        # overlap-add is required.
        bias_cols = jnp.tile(b.astype(jnp.float32), k * k)   # matches (kh,kw,co)
        y = matmul_bias_act(a, wmat, bias_cols, relu=relu)
        return y.reshape(B, k, k, Cout)

    # General case: matmul (Pallas), then col2im overlap-add + bias + ReLU
    # (data movement / elementwise, left to XLA).
    y = matmul_bias_act(a, wmat, jnp.zeros((k * k * Cout,), jnp.float32),
                        relu=False)
    y = y.reshape(B, H, W_, k, k, Cout)
    out = jnp.zeros((B, Ho, Wo, Cout), jnp.float32)
    for kh in range(k):
        for kw in range(k):
            out = out.at[:, kh:kh + (H - 1) * stride + 1:stride,
                         kw:kw + (W_ - 1) * stride + 1:stride, :].add(
                             y[:, :, :, kh, kw, :])
    out = out + b.reshape(1, 1, 1, Cout).astype(jnp.float32)
    if relu:
        out = jnp.maximum(out, 0.0)
    return out


# ---------------------------------------------------------------------------
# Decoder parameters & forward
# ---------------------------------------------------------------------------
def init_decoder_params(key, input_size, depth=8, shape=(3, 64, 64)):
    d = depth
    ks = jax.random.split(key, 10)

    def w(k, s, fan_in):
        return jax.random.normal(k, s, jnp.float32) / jnp.sqrt(fan_in)

    def b(k, n):
        return 0.01 * jax.random.normal(k, (n,), jnp.float32)

    return {
        # Linear(input_size, 32*depth) stored as [in, out]
        "lin_w": w(ks[0], (input_size, 32 * d), input_size),
        "lin_b": b(ks[1], 32 * d),
        # ConvTranspose2d weights in PyTorch layout [Cin, Cout, k, k]
        "ct1_w": w(ks[2], (32 * d, 4 * d, 5, 5), 32 * d * 25),
        "ct1_b": b(ks[3], 4 * d),
        "ct2_w": w(ks[4], (4 * d, 2 * d, 5, 5), 4 * d * 25),
        "ct2_b": b(ks[5], 2 * d),
        "ct3_w": w(ks[6], (2 * d, d, 6, 6), 2 * d * 36),
        "ct3_b": b(ks[7], d),
        "ct4_w": w(ks[8], (d, shape[0], 6, 6), d * 36),
        "ct4_b": b(ks[9], shape[0]),
    }


def decoder_forward(params, x, depth=8, shape=(3, 64, 64)):
    orig_shape = x.shape
    input_size = orig_shape[-1]
    xf = x.reshape(-1, input_size)
    # Linear -> Reshape([-1, 32*depth, 1, 1]); kept NHWC: [B, 1, 1, 32*depth]
    h = matmul_bias_act(xf, params["lin_w"], params["lin_b"], relu=False)
    h = h.reshape(-1, 1, 1, 32 * depth)
    # ConvTranspose stack (NHWC): 1x1 -> 5x5 -> 13x13 -> 30x30 -> 64x64
    h = conv_transpose2d_nhwc(h, params["ct1_w"], params["ct1_b"], 2, relu=True)
    h = conv_transpose2d_nhwc(h, params["ct2_w"], params["ct2_b"], 2, relu=True)
    h = conv_transpose2d_nhwc(h, params["ct3_w"], params["ct3_b"], 2, relu=True)
    h = conv_transpose2d_nhwc(h, params["ct4_w"], params["ct4_b"], 2, relu=False)
    # Single NHWC -> NCHW transpose at the very end.
    mean = jnp.transpose(h, (0, 3, 1, 2)).reshape(orig_shape[:-1] + shape)
    # TODO(synk): td.Independent(td.Normal(mean, 1), 3) is a distribution
    # wrapper with no Pallas equivalent; we return the mean (scale == 1).
    return mean


if __name__ == "__main__":
    key = jax.random.PRNGKey(0)
    kp, kx = jax.random.split(key)

    input_size, depth, shape = 32, 8, (3, 64, 64)
    params = init_decoder_params(kp, input_size, depth, shape)

    x = jax.random.normal(kx, (2, input_size), jnp.float32)   # batch=2 latents
    mean = decoder_forward(params, x, depth, shape)
    jax.block_until_ready(mean)

    assert mean.shape == (2,) + shape, mean.shape
    assert mean.dtype == jnp.float32
    print("KERNEL_OK")
</pallas_src>

<mosaic_0001>
module attributes {stable_mosaic.version = 11 : i64} {
  func.func @_mm_bias_act_kernel(%arg0: i32, %arg1: memref<8x32xbf16, #tpu.memory_space<vmem>>, %arg2: memref<32x256xbf16, #tpu.memory_space<vmem>>, %arg3: memref<1x256xf32, #tpu.memory_space<vmem>>, %arg4: memref<8x256xf32, #tpu.memory_space<vmem>>) attributes {dimension_semantics = [#tpu.dimension_semantics<parallel>], iteration_bounds = array<i64: 1>, scalar_prefetch = 0 : i64, scratch_operands = 0 : i64, tpu.core_type = #tpu.core_type<tc>, window_params = [{transform_indices = @transform_0, window_bounds = array<i64: 8, 32>}, {pipeline_mode = #tpu.pipeline_mode<synchronous>, transform_indices = @transform_1, window_bounds = array<i64: 32, 256>}, {pipeline_mode = #tpu.pipeline_mode<synchronous>, transform_indices = @transform_2, window_bounds = array<i64: 1, 256>}, {transform_indices = @transform_3, window_bounds = array<i64: 8, 256>}]} {
    %c0 = arith.constant 0 : index
    %c0_0 = arith.constant 0 : index
    %0 = vector.load %arg1[%c0, %c0_0] : memref<8x32xbf16, #tpu.memory_space<vmem>>, vector<8x32xbf16>
    %c0_1 = arith.constant 0 : index
    %c0_2 = arith.constant 0 : index
    %1 = vector.load %arg2[%c0_1, %c0_2] : memref<32x256xbf16, #tpu.memory_space<vmem>>, vector<32x256xbf16>
    %cst = arith.constant dense<0.000000e+00> : vector<8x256xf32>
    %2 = tpu.matmul %0, %1, %cst {dimension_numbers = #tpu.dot_dimension_numbers<[1], [0], [0], [1], [0, 0, 1, 1], [], []>} : vector<8x32xbf16>, vector<32x256xbf16>, vector<8x256xf32> -> vector<8x256xf32>
    %c0_3 = arith.constant 0 : index
    %c0_4 = arith.constant 0 : index
    %3 = vector.load %arg3[%c0_3, %c0_4] : memref<1x256xf32, #tpu.memory_space<vmem>>, vector<1x256xf32>
    %4 = vector.broadcast %3 : vector<1x256xf32> to vector<8x256xf32>
    %5 = arith.addf %2, %4 : vector<8x256xf32>
    %c0_5 = arith.constant 0 : index
    %c0_6 = arith.constant 0 : index
    %6 = vector.load %arg4[%c0_5, %c0_6] : memref<8x256xf32, #tpu.memory_space<vmem>>, vector<8x256xf32>
    tpu.vector_store %arg4[%c0_5, %c0_6], %5 {strides = array<i32>} : memref<8x256xf32, #tpu.memory_space<vmem>>, vector<8x256xf32>,
    return
  }
  func.func @transform_0(%arg0: i32) -> (i32, i32) {
    %c0_i32 = arith.constant 0 : i32
    %c0_i32_0 = arith.constant 0 : i32
    return %arg0, %c0_i32 : i32, i32
  }
  func.func @transform_1(%arg0: i32) -> (i32, i32) {
    %c0_i32 = arith.constant 0 : i32
    %c0_i32_0 = arith.constant 0 : i32
    %c0_i32_1 = arith.constant 0 : i32
    return %c0_i32, %c0_i32_0 : i32, i32
  }
  func.func @transform_2(%arg0: i32) -> (i32, i32) {
    %c0_i32 = arith.constant 0 : i32
    %c0_i32_0 = arith.constant 0 : i32
    %c0_i32_1 = arith.constant 0 : i32
    return %c0_i32, %c0_i32_0 : i32, i32
  }
  func.func @transform_3(%arg0: i32) -> (i32, i32) {
    %c0_i32 = arith.constant 0 : i32
    %c0_i32_0 = arith.constant 0 : i32
    return %arg0, %c0_i32 : i32, i32
  }
}

</mosaic_0001>

<llo_original>
// kernel: tpu_custom_call.1
$region0: #{tpu_custom_call.1}
  #allocation0 [shape = 'u32[]', space=smem, size = 0x4, offset = 0x4, fixed_abs, tag = 'smem constant byte address 0x4 - core index']
  #allocation1 [shape = 'u32[144,128]{1,0:T(1,128)}', space=vmem, size = 0x12000, scoped, tag = 'internal scratch']
  %s0 = inlined_call_operand.hbm [shape: bf16[8,32], index: 0, kind: input, shape index: {}]
  %s1 = inlined_call_operand.hbm [shape: bf16[32,256], index: 1, kind: input, shape index: {}]
  %s2 = inlined_call_operand.vmem [shape: f32[1,256], index: 2, kind: input, shape index: {}]
  %s3 = inlined_call_operand.hbm [shape: f32[8,256], index: 3, kind: output, shape index: {}]
  %s4 = sld [smem:[#allocation0]]
  $region30: #{tpu_custom_call.1} parent=0
    _
  %s6 = ssub.s32 1, %s4
  %s7 = scalar_select 0, %s6, %s4
  $region1: #{tpu_custom_call.1} parent=0
    #allocation2 [shape = 'u8[2048]{0}', space=vmem, size = 0x800, scoped, tag = 'input window, operand 0, single buffered']
    #allocation3 [shape = 's32[1]{0}', space=sflag, size = 0x4, scoped, tag = 'scoped memory for tpu_custom_call.1']
    #allocation4 [shape = 's32[1]{0}', space=sflag, size = 0x4, scoped, tag = 'scoped memory for tpu_custom_call.1']
    #allocation5 [shape = 'u8[16384]{0}', space=vmem, size = 0x4000, scoped, tag = 'input window, operand 1, single buffered']
    #allocation6 [shape = 's32[1]{0}', space=sflag, size = 0x4, scoped, tag = 'scoped memory for tpu_custom_call.1']
    #allocation7 [shape = 'u8[8192]{0}', space=vmem, size = 0x2000, scoped, tag = 'output window, operand 0, single buffered']
    %8 = vsyncpa [#allocation3], 0
    %9 = vsyncpa [#allocation6], 0
    %10 = vsyncpa [#allocation4], 0
    // Predicated region
    $region2: #{tpu_custom_call.1} parent=1 // pred_check
      _
    $region3: #{tpu_custom_call.1} parent=1 // pred_check_branch
      %12 = sbr.rel (0) target = $region5
    $region4: #{tpu_custom_call.1} parent=1 // pred_region
      %s14 = ssub.s32 64, 64
      %15 = vsyncadd [#allocation3], %s14
      %s17 = sshll.u32 [#allocation2], 4
      %s18 = int_to_ptr.vmem [resolvable:$true] %s17
      %20 = dma.hbm_to_vmem [thread:$0]  %s0, 64, %s18, [#allocation3]
    $region5: #{tpu_custom_call.1} parent=1 // pred_fallthru
      _
    // Predicated region
    $region6: #{tpu_custom_call.1} parent=1 // pred_check
      _
    $region7: #{tpu_custom_call.1} parent=1 // pred_check_branch
      %22 = sbr.rel (0) target = $region9
    $region8: #{tpu_custom_call.1} parent=1 // pred_region
      %s24 = ssub.s32 512, 512
      %25 = vsyncadd [#allocation6], %s24
      %s26 = sshll.u32 [#allocation5], 4
      %s27 = int_to_ptr.vmem [resolvable:$true] %s26
      %32 = dma.hbm_to_vmem [thread:$0]  %s1, 512, %s27, [#allocation6], 128, 128, 8
    $region9: #{tpu_custom_call.1} parent=1 // pred_fallthru
      _
    // Predicated region
    $region10: #{tpu_custom_call.1} parent=1 // pred_check
      _
    $region11: #{tpu_custom_call.1} parent=1 // pred_check_branch
      %34 = sbr.rel (0) target = $region13
    $region12: #{tpu_custom_call.1} parent=1 // pred_region
      _
    $region13: #{tpu_custom_call.1} parent=1 // pred_fallthru
      _
    // Predicated region
    $region14: #{tpu_custom_call.1} parent=1 // pred_check
      _
    $region15: #{tpu_custom_call.1} parent=1 // pred_check_branch
      %36 = sbr.rel (0) target = $region17
    $region16: #{tpu_custom_call.1} parent=1 // pred_region
      %37 = dma.done [#allocation3], 64
    $region17: #{tpu_custom_call.1} parent=1 // pred_fallthru
      _
    // Predicated region
    $region18: #{tpu_custom_call.1} parent=1 // pred_check
      _
    $region19: #{tpu_custom_call.1} parent=1 // pred_check_branch
      %39 = sbr.rel (0) target = $region21
    $region20: #{tpu_custom_call.1} parent=1 // pred_region
      %40 = dma.done [#allocation6], 512
    $region21: #{tpu_custom_call.1} parent=1 // pred_fallthru
      _
    %v42 = vld [vmem:[#allocation2] sm:$0xf]
    %v43 = vld [vmem:[#allocation5] sm:$0xff]
    %v44 = vld [vmem:[#allocation5 + $0x8] sm:$0xff]
    %v45 = vld [vmem:[#allocation5 + $0x10] sm:$0xff]
    %v46 = vld [vmem:[#allocation5 + $0x18] sm:$0xff]
    %v47 = vld [vmem:[%s2] sm:$0x3]
    %v49 = vlaneseq
    %v50 = vshrl.u32 %v49, 7
    %v51 = vsub.s32 0, %v50
    %v52 = vrot.slane %v47, %v51
    %v53 = vlaneseq
    %v54 = vshrl.u32 %v53, 7
    %v55 = vsub.s32 1, %v54
    %v56 = vrot.slane %v47, %v55
    %v63 = vunpack.c.l.b16 %v43
    %v64 = vunpack.c.h.b16 %v43
    %v65 = vunpack.c.l.b16 %v44
    %v66 = vunpack.c.h.b16 %v44
    %v67 = vunpack.c.l.b16 %v45
    %v68 = vunpack.c.h.b16 %v45
    %v69 = vunpack.c.l.b16 %v46
    %v70 = vunpack.c.h.b16 %v46
    %v71 = vpack.c.b16 %v65, %v63
    %v72 = vpack.c.b16 %v66, %v64
    %v73 = vpack.c.b16 %v69, %v67
    %v74 = vpack.c.b16 %v70, %v68
    %vm79 = vcmask 261120
    %v81 = vsel %vm79, %v42, 0
    %83 = vmatprep.subr.bf16.mxu0 0
    %84 = vmatpush1.bf16.msra.mxu0 0
    %85 = vmatprep.subr.bf16.mxu0 0
    %86 = vmatpush1.bf16.msra.mxu0 0
    %87 = vmatprep.subr.bf16.mxu0 0
    %88 = vmatpush1.bf16.msra.mxu0 0
    %89 = vmatprep.subr.bf16.mxu0 0
    %90 = vmatpush1.bf16.msra.mxu0 0
    %91 = vmatprep.subr.bf16.mxu0 0
    %92 = vmatpush1.bf16.msra.mxu0 0
    %93 = vmatprep.subr.bf16.mxu0 0
    %94 = vmatpush1.bf16.msra.mxu0 0
    %95 = vmatprep.subr.bf16.mxu0 %v74
    %96 = vmatpush1.bf16.msra.mxu0 %v73
    %97 = vmatprep.subr.bf16.mxu0 %v72
    %98 = vmatpush1.bf16.msra.mxu0 %v71
    %99 = vmatprep.subr.bf16.mxu0 0
    %100 = vmatpush2.bf16.msra.mxu0 0
    %101 = vmatprep.subr.bf16.mxu0 0
    %102 = vmatpush2.bf16.msra.mxu0 0
    %103 = vmatprep.subr.bf16.mxu0 0
    %104 = vmatpush2.bf16.msra.mxu0 0
    %105 = vmatprep.subr.bf16.mxu0 0
    %106 = vmatpush2.bf16.msra.mxu0 0
    %107 = vmatprep.subr.bf16.mxu0 0
    %108 = vmatpush2.bf16.msra.mxu0 0
    %109 = vmatprep.subr.bf16.mxu0 0
    %110 = vmatpush2.bf16.msra.mxu0 0
    %111 = vmatprep.subr.bf16.mxu0 0
    %112 = vmatpush2.bf16.msra.mxu0 0
    %113 = vmatprep.subr.bf16.mxu0 0
    %114 = vmatpush2.bf16.msra.mxu0 0
    %115 = vmatprep.mubr.bf16.mxu0 0
    %116 = vmatmul.mubr.bf16.gmra.mxu0 %v81
    %v117 = vpop.f32.mrf.mxu0
    %v118 = vadd.f32 %v52, %v117
    %v119 = vpop.f32.mrf.mxu0
    %v120 = vadd.f32 %v56, %v119
    %v121 = vpop.f32.mrf.mxu0
    %v122 = vpop.f32.mrf.mxu0
    %123 = vdwg.mxu0
    %124 = vst [vmem:[#allocation7] sm:$0xff] %v118
    %125 = vst [vmem:[#allocation7 + $0x8] sm:$0xff] %v120
    // Predicated region
    $region22: #{tpu_custom_call.1} parent=1 // pred_check
      _
    $region23: #{tpu_custom_call.1} parent=1 // pred_check_branch
      %127 = sbr.rel (0) target = $region25
    $region24: #{tpu_custom_call.1} parent=1 // pred_region
      %s129 = ssub.s32 256, 256
      %130 = vsyncadd [#allocation4], %s129
      %s132 = sshll.u32 [#allocation7], 4
      %s133 = int_to_ptr.vmem [resolvable:$true] %s132
      %135 = dma.vmem_to_hbm [thread:$0]  %s133, 256, %s3, [#allocation4]
    $region25: #{tpu_custom_call.1} parent=1 // pred_fallthru
      _
    // Predicated region
    $region26: #{tpu_custom_call.1} parent=1 // pred_check
      _
    $region27: #{tpu_custom_call.1} parent=1 // pred_check_branch
      %137 = sbr.rel (0) target = $region29
    $region28: #{tpu_custom_call.1} parent=1 // pred_region
      %138 = dma.done [#allocation4], 256
    $region29: #{tpu_custom_call.1} parent=1 // pred_fallthru
      _
    %139 = vsyncpa [#allocation3], 1
    %140 = vsyncpa [#allocation6], 1
    %141 = vsyncpa [#allocation4], 1

</llo_original>
